<compile_context>
chip_gen: v7x
topology: tpu7x:2x2x1
jax: 0.10.0
libtpu: 0.0.40
codegen_flags: <defaults>
</compile_context>

<pallas_src>
import functools

import jax
import jax.numpy as jnp
from jax.experimental import pallas as pl
from jax.experimental.pallas import tpu as pltpu


def _round_up(x, m):
    return ((x + m - 1) // m) * m


def _seq_mae_loss_kernel(logits_ref, labels_ref, out_ref, *, n_rows):
    """One grid step: per-block partial sums of CE loss / correctness / count."""
    i = pl.program_id(0)
    tile_n, v = logits_ref.shape

    logits = logits_ref[...]                       # (tile_n, V) in input dtype
    labels = labels_ref[...]                       # (tile_n, 1) int32; -1 == not selected

    # Row validity: selected (label >= 0) AND inside the un-padded row range.
    # The last block may extend past n_rows (no host-side pad of the logits);
    # those rows can hold garbage/NaN, so they are removed with jnp.where.
    row_idx = i * tile_n + jax.lax.broadcasted_iota(jnp.int32, (tile_n, 1), 0)
    sel = (labels >= 0) & (row_idx < n_rows)       # (tile_n, 1) bool

    # One-hot via a single (1, V) lane iota broadcast against the label column.
    lane = jax.lax.broadcasted_iota(jnp.int32, (1, v), 1)
    onehot = lane == labels                        # (tile_n, V)

    # Cross entropy:  loss = logsumexp(logits) - logits[label]
    # Row max / subtract stay in the input dtype (bf16 VALU on v6e/v7x);
    # upcast to f32 only going into the exp.
    row_max = jnp.max(logits, axis=-1, keepdims=True)                  # (tile_n, 1)
    shifted = (logits - row_max).astype(jnp.float32)
    sum_exp = jnp.sum(jnp.exp(shifted), axis=-1, keepdims=True)        # (tile_n, 1) f32
    picked = jnp.sum(jnp.where(onehot, logits, jnp.zeros((), logits.dtype)),
                     axis=-1, keepdims=True)                           # exact (one-hot)
    per_token_loss = (row_max.astype(jnp.float32) - picked.astype(jnp.float32)
                      + jnp.log(sum_exp))                              # (tile_n, 1) f32

    # Argmax correctness: label's logit attains the row max (ties count correct;
    # identical to torch.argmax comparison except on exact float ties).
    correct = picked == row_max                                        # (tile_n, 1) bool

    # Per-block partial sums (selection via where so garbage rows never leak).
    loss_sum = jnp.sum(jnp.where(sel, per_token_loss, 0.0), keepdims=True)   # (1, 1)
    corr_sum = jnp.sum(jnp.where(sel & correct, 1.0, 0.0), keepdims=True)    # (1, 1)
    cnt_sum = jnp.sum(jnp.where(sel, 1.0, 0.0), keepdims=True)               # (1, 1)

    # Pack the three partials into lanes 0..2 of this block's (1, 8, 128) slot.
    slot = jax.lax.broadcasted_iota(jnp.int32, (1, 8, 128), 2)
    out_ref[...] = jnp.where(slot == 0, loss_sum,
                             jnp.where(slot == 1, corr_sum,
                                       jnp.where(slot == 2, cnt_sum, 0.0)))


def internal_seq_mae_loss(seq_logits, crab_R, mask_seq, *, tile_n=None):
    """seq_logits: (B, L, V) float (f32 or bf16); crab_R: (B, L) int labels;
    mask_seq: (B, L, 1) bool mask.  Returns dict of two f32 scalars."""
    B, L, V = seq_logits.shape
    N = B * L

    in_dtype = seq_logits.dtype
    in_bytes = jnp.dtype(in_dtype).itemsize
    # sublane pack: 8 rows for 4-byte, 16 for 2-byte, 32 for 1-byte dtypes
    pack = max(8, 32 // max(1, in_bytes))

    # ---- generation-aware VMEM limit & budget ----
    try:
        info = pltpu.get_tpu_info()
        vmem_cap = int(getattr(info, "vmem_capacity_bytes", 0)) or 64 * 1024 * 1024
    except Exception:
        vmem_cap = 64 * 1024 * 1024
    # <= ~48 MiB on v7x (64 MiB physical), up to 96 MiB on v5e/v6e (128 MiB).
    vmem_limit = min((vmem_cap * 3) // 4, 112 * 1024 * 1024)
    vmem_budget = (vmem_limit * 7) // 10          # headroom for what the model misses

    # ---- layout-aware per-row VMEM cost (bytes per tile row) ----
    V_pad = _round_up(V, 128)
    per_row_vmem = (
        2 * V_pad * in_bytes                       # logits block, double-buffered, lane-padded
        + 2 * 128 * 4                              # (tile_n,1) i32 label column, lane-padded, x2 buffers
        + V_pad * 4                                # f32 shifted/exp temporary over the tile
        + (V_pad * 4 if in_bytes < 4 else 0)       # extra f32 tile temp on the bf16 path
        + V_pad                                    # one-hot / compare mask temporary
        + 6 * 128 * 4                              # ~6 live lane-padded per-row f32 columns
    )

    if tile_n is None:
        tile_vmem = max(pack, vmem_budget // per_row_vmem)
        # HBM-block target ~4 MiB of logits bytes per grid step (>= ~1 MiB keeps
        # the DMA pipeline at the HBM roofline; bigger buys little, costs VMEM).
        tile_hbm = max(pack, (4 * 1024 * 1024) // (V * in_bytes))
        tile_n = min(tile_vmem, tile_hbm)
    tile_n = max(pack, (int(tile_n) // pack) * pack)
    tile_n = min(tile_n, _round_up(N, pack))       # never larger than the problem

    grid = pl.cdiv(N, tile_n)                      # ragged tail handled in-kernel

    logits2d = seq_logits.reshape(N, V)
    labels1d = crab_R.reshape(N).astype(jnp.int32)
    mask1d = mask_seq.reshape(N)
    # merged label/mask stream: -1 == "not selected" (tiny O(N) prep, no logits pad)
    lab_enc = jnp.where(mask1d, labels1d, -1).reshape(N, 1)

    kernel = functools.partial(_seq_mae_loss_kernel, n_rows=N)

    partials = pl.pallas_call(
        kernel,
        out_shape=jax.ShapeDtypeStruct((grid, 8, 128), jnp.float32),
        grid_spec=pltpu.PrefetchScalarGridSpec(
            num_scalar_prefetch=0,
            grid=(grid,),
            in_specs=[
                pl.BlockSpec((tile_n, V), lambda i: (i, 0)),
                pl.BlockSpec((tile_n, 1), lambda i: (i, 0)),
            ],
            out_specs=pl.BlockSpec((1, 8, 128), lambda i: (i, 0, 0)),
        ),
        compiler_params=pltpu.CompilerParams(
            # Each grid step writes its own output block -> safe to shard across
            # both v7x TensorCores.
            dimension_semantics=("parallel",),
            vmem_limit_bytes=int(vmem_limit),
        ),
    )(logits2d, lab_enc)

    # Tiny JAX epilogue: sum per-block partials and divide once.
    sums = jnp.sum(partials[:, 0, :3], axis=0)     # (3,) = [loss_sum, corr_sum, count]
    cnt = sums[2]
    return {"seq_type_loss": sums[0] / cnt, "seq_type_acc": sums[1] / cnt}


def _reference(seq_logits, crab_R, mask_seq, tie_rule_acc=False):
    """Pure-JAX reference mirroring the PyTorch forward."""
    logits = seq_logits.reshape(-1, seq_logits.shape[-1]).astype(jnp.float32)
    labels = crab_R.reshape(-1).astype(jnp.int32)
    mask = mask_seq.reshape(-1).astype(jnp.float32)
    lse = jax.nn.logsumexp(logits, axis=-1)
    picked = jnp.take_along_axis(logits, labels[:, None], axis=-1)[:, 0]
    ce = lse - picked
    if tie_rule_acc:
        correct = (picked == jnp.max(logits, axis=-1)).astype(jnp.float32)
    else:
        correct = (jnp.argmax(logits, axis=-1) == labels).astype(jnp.float32)
    cnt = jnp.sum(mask)
    return jnp.sum(ce * mask) / cnt, jnp.sum(correct * mask) / cnt


if __name__ == "__main__":
    key = jax.random.PRNGKey(0)

    def make_inputs(subkey, B, L, V, dtype):
        k1, k2, k3 = jax.random.split(subkey, 3)
        logits = jax.random.normal(k1, (B, L, V), dtype=jnp.float32).astype(dtype)
        labels = jax.random.randint(k2, (B, L), 0, V, dtype=jnp.int32)
        mask = jax.random.bernoulli(k3, 0.5, (B, L, 1))
        # guarantee at least one masked token (PyTorch mean over empty is NaN)
        mask = mask.at[0, 0, 0].set(True)
        return logits, labels, mask

    cases = [
        # (B, L, V, dtype, tile_n, loss_atol, loss_rtol, tie_rule_acc)
        (2, 8, 32, jnp.float32, None, 1e-5, 1e-5, False),   # basic f32
        (3, 10, 24, jnp.float32, None, 1e-5, 1e-5, False),  # N=30 -> ragged last block
        (3, 10, 24, jnp.float32, 8, 1e-5, 1e-5, False),     # grid > 1 + ragged tail
        (2, 8, 32, jnp.bfloat16, None, 5e-2, 5e-2, True),   # bf16 streaming path
    ]
    for idx, (B, L, V, dtype, tn, atol, rtol, tie) in enumerate(cases):
        logits, labels, mask = make_inputs(jax.random.fold_in(key, idx), B, L, V, dtype)
        out = internal_seq_mae_loss(logits, labels, mask, tile_n=tn)
        loss = jax.block_until_ready(out["seq_type_loss"])
        acc = jax.block_until_ready(out["seq_type_acc"])

        ref_loss, ref_acc = _reference(logits, labels, mask, tie_rule_acc=tie)
        assert jnp.allclose(loss, ref_loss, atol=atol, rtol=rtol), (idx, loss, ref_loss)
        assert jnp.allclose(acc, ref_acc, atol=1e-6), (idx, acc, ref_acc)

    print("KERNEL_OK")
</pallas_src>

<mosaic_0001>
module attributes {stable_mosaic.version = 11 : i64} {
  func.func @_seq_mae_loss_kernel(%arg0: i32, %arg1: memref<16x32xf32, #tpu.memory_space<vmem>>, %arg2: memref<16x1xi32, #tpu.memory_space<vmem>>, %arg3: memref<1x8x128xf32, #tpu.memory_space<vmem>>) attributes {dimension_semantics = [#tpu.dimension_semantics<parallel>], iteration_bounds = array<i64: 1>, scalar_prefetch = 0 : i64, scratch_operands = 0 : i64, tpu.core_type = #tpu.core_type<tc>, window_params = [{transform_indices = @transform_0, window_bounds = array<i64: 16, 32>}, {transform_indices = @transform_1, window_bounds = array<i64: 16, 1>}, {transform_indices = @transform_2, window_bounds = array<i64: 1, 8, 128>}]} {
    %c0 = arith.constant 0 : index
    %c0_0 = arith.constant 0 : index
    %0 = vector.load %arg1[%c0, %c0_0] : memref<16x32xf32, #tpu.memory_space<vmem>>, vector<16x32xf32>
    %c0_1 = arith.constant 0 : index
    %c0_2 = arith.constant 0 : index
    %1 = vector.load %arg2[%c0_1, %c0_2] : memref<16x1xi32, #tpu.memory_space<vmem>>, vector<16x1xi32>
    %c16_i32 = arith.constant 16 : i32
    %2 = arith.muli %arg0, %c16_i32 : i32
    %3 = tpu.iota {dimensions = array<i32: 0>} : vector<16x1xi32>
    %4 = vector.broadcast %2 : i32 to vector<16x1xi32>
    %5 = arith.addi %4, %3 : vector<16x1xi32>
    %c0_i32 = arith.constant 0 : i32
    %6 = vector.broadcast %c0_i32 : i32 to vector<16x1xi32>
    %7 = arith.cmpi sge, %1, %6 : vector<16x1xi32>
    %c16_i32_3 = arith.constant 16 : i32
    %8 = vector.broadcast %c16_i32_3 : i32 to vector<16x1xi32>
    %9 = arith.cmpi slt, %5, %8 : vector<16x1xi32>
    %10 = arith.andi %7, %9 : vector<16x1xi1>
    %11 = tpu.iota {dimensions = array<i32: 1>} : vector<1x32xi32>
    %12 = vector.broadcast %11 : vector<1x32xi32> to vector<16x32xi32>
    %13 = vector.broadcast %1 : vector<16x1xi32> to vector<16x32xi32>
    %14 = arith.cmpi eq, %12, %13 : vector<16x32xi32>
    %cst = arith.constant dense<0xFF800000> : vector<16xf32>
    %15 = vector.multi_reduction <maximumf>, %0, %cst [1] : vector<16x32xf32> to vector<16xf32>
    %16 = vector.shape_cast %15 : vector<16xf32> to vector<16x1xf32>
    %17 = vector.broadcast %16 : vector<16x1xf32> to vector<16x32xf32>
    %18 = arith.subf %0, %17 : vector<16x32xf32>
    %19 = math.exp %18 : vector<16x32xf32>
    %cst_4 = arith.constant dense<0.000000e+00> : vector<16xf32>
    %20 = vector.multi_reduction <add>, %19, %cst_4 [1] : vector<16x32xf32> to vector<16xf32>
    %21 = vector.shape_cast %20 : vector<16xf32> to vector<16x1xf32>
    %cst_5 = arith.constant 0.000000e+00 : f32
    %22 = vector.broadcast %cst_5 : f32 to vector<16x32xf32>
    %23 = arith.select %14, %0, %22 : vector<16x32xi1>, vector<16x32xf32>
    %cst_6 = arith.constant dense<0.000000e+00> : vector<16xf32>
    %24 = vector.multi_reduction <add>, %23, %cst_6 [1] : vector<16x32xf32> to vector<16xf32>
    %25 = vector.shape_cast %24 : vector<16xf32> to vector<16x1xf32>
    %26 = arith.subf %16, %25 : vector<16x1xf32>
    %27 = math.log %21 : vector<16x1xf32>
    %28 = arith.addf %26, %27 : vector<16x1xf32>
    %29 = arith.cmpf oeq, %25, %16 : vector<16x1xf32>
    %cst_7 = arith.constant 0.000000e+00 : f32
    %30 = vector.broadcast %cst_7 : f32 to vector<16x1xf32>
    %31 = arith.select %10, %28, %30 : vector<16x1xi1>, vector<16x1xf32>
    %32 = vector.shape_cast %31 : vector<16x1xf32> to vector<1x16x1xf32>
    %cst_8 = arith.constant dense<0.000000e+00> : vector<1xf32>
    %33 = vector.multi_reduction <add>, %32, %cst_8 [1, 2] : vector<1x16x1xf32> to vector<1xf32>
    %34 = vector.shape_cast %33 : vector<1xf32> to vector<1x1x1xf32>
    %35 = vector.extract %34[0, 0, 0] : f32 from vector<1x1x1xf32>
    %36 = vector.broadcast %35 : f32 to vector<1x1xf32>
    %37 = arith.andi %10, %29 : vector<16x1xi1>
    %cst_9 = arith.constant 1.000000e+00 : f32
    %cst_10 = arith.constant 0.000000e+00 : f32
    %38 = vector.broadcast %cst_9 : f32 to vector<16x1xf32>
    %39 = vector.broadcast %cst_10 : f32 to vector<16x1xf32>
    %40 = arith.select %37, %38, %39 : vector<16x1xi1>, vector<16x1xf32>
    %41 = vector.shape_cast %40 : vector<16x1xf32> to vector<1x16x1xf32>
    %cst_11 = arith.constant dense<0.000000e+00> : vector<1xf32>
    %42 = vector.multi_reduction <add>, %41, %cst_11 [1, 2] : vector<1x16x1xf32> to vector<1xf32>
    %43 = vector.shape_cast %42 : vector<1xf32> to vector<1x1x1xf32>
    %44 = vector.extract %43[0, 0, 0] : f32 from vector<1x1x1xf32>
    %45 = vector.broadcast %44 : f32 to vector<1x1xf32>
    %cst_12 = arith.constant 1.000000e+00 : f32
    %cst_13 = arith.constant 0.000000e+00 : f32
    %46 = vector.broadcast %cst_12 : f32 to vector<16x1xf32>
    %47 = vector.broadcast %cst_13 : f32 to vector<16x1xf32>
    %48 = arith.select %10, %46, %47 : vector<16x1xi1>, vector<16x1xf32>
    %49 = vector.shape_cast %48 : vector<16x1xf32> to vector<1x16x1xf32>
    %cst_14 = arith.constant dense<0.000000e+00> : vector<1xf32>
    %50 = vector.multi_reduction <add>, %49, %cst_14 [1, 2] : vector<1x16x1xf32> to vector<1xf32>
    %51 = vector.shape_cast %50 : vector<1xf32> to vector<1x1x1xf32>
    %52 = vector.extract %51[0, 0, 0] : f32 from vector<1x1x1xf32>
    %53 = vector.broadcast %52 : f32 to vector<1x1xf32>
    %54 = tpu.iota {dimensions = array<i32: 2>} : vector<1x8x128xi32>
    %c0_i32_15 = arith.constant 0 : i32
    %55 = vector.broadcast %c0_i32_15 : i32 to vector<1x8x128xi32>
    %56 = arith.cmpi eq, %54, %55 : vector<1x8x128xi32>
    %c1_i32 = arith.constant 1 : i32
    %57 = vector.broadcast %c1_i32 : i32 to vector<1x8x128xi32>
    %58 = arith.cmpi eq, %54, %57 : vector<1x8x128xi32>
    %c2_i32 = arith.constant 2 : i32
    %59 = vector.broadcast %c2_i32 : i32 to vector<1x8x128xi32>
    %60 = arith.cmpi eq, %54, %59 : vector<1x8x128xi32>
    %cst_16 = arith.constant 0.000000e+00 : f32
    %61 = vector.shape_cast %53 : vector<1x1xf32> to vector<1x1x1xf32>
    %62 = vector.broadcast %61 : vector<1x1x1xf32> to vector<1x8x128xf32>
    %63 = vector.broadcast %cst_16 : f32 to vector<1x8x128xf32>
    %64 = arith.select %60, %62, %63 : vector<1x8x128xi1>, vector<1x8x128xf32>
    %65 = vector.shape_cast %45 : vector<1x1xf32> to vector<1x1x1xf32>
    %66 = vector.broadcast %65 : vector<1x1x1xf32> to vector<1x8x128xf32>
    %67 = arith.select %58, %66, %64 : vector<1x8x128xi1>, vector<1x8x128xf32>
    %68 = vector.shape_cast %36 : vector<1x1xf32> to vector<1x1x1xf32>
    %69 = vector.broadcast %68 : vector<1x1x1xf32> to vector<1x8x128xf32>
    %70 = arith.select %56, %69, %67 : vector<1x8x128xi1>, vector<1x8x128xf32>
    %c0_17 = arith.constant 0 : index
    %c0_18 = arith.constant 0 : index
    %c0_19 = arith.constant 0 : index
    %71 = vector.load %arg3[%c0_17, %c0_18, %c0_19] : memref<1x8x128xf32, #tpu.memory_space<vmem>>, vector<1x8x128xf32>
    tpu.vector_store %arg3[%c0_17, %c0_18, %c0_19], %70 {strides = array<i32>} : memref<1x8x128xf32, #tpu.memory_space<vmem>>, vector<1x8x128xf32>,
    return
  }
  func.func @transform_0(%arg0: i32) -> (i32, i32) {
    %c0_i32 = arith.constant 0 : i32
    %c0_i32_0 = arith.constant 0 : i32
    return %arg0, %c0_i32 : i32, i32
  }
  func.func @transform_1(%arg0: i32) -> (i32, i32) {
    %c0_i32 = arith.constant 0 : i32
    %c0_i32_0 = arith.constant 0 : i32
    return %arg0, %c0_i32 : i32, i32
  }
  func.func @transform_2(%arg0: i32) -> (i32, i32, i32) {
    %c0_i32 = arith.constant 0 : i32
    %c0_i32_0 = arith.constant 0 : i32
    %c0_i32_1 = arith.constant 0 : i32
    return %arg0, %c0_i32, %c0_i32_0 : i32, i32, i32
  }
}

</mosaic_0001>

<llo_original>
// kernel: tpu_custom_call.1
$region0: #{tpu_custom_call.1}
  #allocation0 [shape = 'u32[]', space=smem, size = 0x4, offset = 0x4, fixed_abs, tag = 'smem constant byte address 0x4 - core index']
  #allocation1 [shape = 'u32[144,128]{1,0:T(1,128)}', space=vmem, size = 0x12000, scoped, tag = 'internal scratch']
  %s0 = inlined_call_operand.vmem [shape: f32[16,32], index: 0, kind: input, shape index: {}]
  %s1 = inlined_call_operand.vmem [shape: s32[16,1], index: 1, kind: input, shape index: {}]
  %s2 = inlined_call_operand.hbm [shape: f32[1,8,128], index: 2, kind: output, shape index: {}]
  %s3 = sld [smem:[#allocation0]]
  $region18: #{tpu_custom_call.1} parent=0
    _
  %s5 = ssub.s32 1, %s3
  %s6 = scalar_select 0, %s5, %s3
  $region1: #{tpu_custom_call.1} parent=0
    #allocation2 [shape = 'u8[4096]{0}', space=vmem, size = 0x1000, scoped, tag = 'output window, operand 0, single buffered']
    #allocation3 [shape = 's32[1]{0}', space=sflag, size = 0x4, scoped, tag = 'scoped memory for tpu_custom_call.1']
    %7 = vsyncpa [#allocation3], 0
    // Predicated region
    $region2: #{tpu_custom_call.1} parent=1 // pred_check
      _
    $region3: #{tpu_custom_call.1} parent=1 // pred_check_branch
      %9 = sbr.rel (0) target = $region5
    $region4: #{tpu_custom_call.1} parent=1 // pred_region
      _
    $region5: #{tpu_custom_call.1} parent=1 // pred_fallthru
      _
    // Predicated region
    $region6: #{tpu_custom_call.1} parent=1 // pred_check
      _
    $region7: #{tpu_custom_call.1} parent=1 // pred_check_branch
      %11 = sbr.rel (0) target = $region9
    $region8: #{tpu_custom_call.1} parent=1 // pred_region
      _
    $region9: #{tpu_custom_call.1} parent=1 // pred_fallthru
      _
    %v12 = vld [vmem:[%s0] sm:$0xff]
    %v13 = vld [vmem:[%s0 + $0x8] sm:$0xff]
    %v14 = vld [vmem:[%s1] sm:$0xff]
    %v15 = vld [vmem:[%s1 + $0x8] sm:$0xff]
    %s16 = smul.u32 0, 16
    %v17 = vlaneseq
    %v18 = vshrl.u32 %v17, 7
    %v19 = vadd.s32 %v18, 8
    %v20 = vstv %s16
    %v21 = vadd.s32 %v20, %v18
    %v22 = vadd.s32 %v20, %v19
    %vm23 = vcmp.ge.s32.totalorder %v14, 0
    %vm24 = vcmp.ge.s32.totalorder %v15, 0
    %vm25 = vcmp.lt.s32.totalorder %v21, 16
    %vm26 = vcmp.lt.s32.totalorder %v22, 16
    %vm27 = vmand %vm23, %vm25
    %vm28 = vmand %vm24, %vm26
    %v29 = vlaneseq
    %v30 = vand.u32 %v29, 127
    %31 = vset.pattern.permute.xlu0 0
    %32 = vperm.xlu0 %31, %v14
    %v33 = vpop.permute.xlu0 %32
    %34 = vset.pattern.permute.xlu0 0
    %35 = vperm.xlu0 %34, %v15
    %v36 = vpop.permute.xlu0 %35
    %vm37 = vcmp.eq.s32.totalorder %v30, %v33
    %vm38 = vcmp.eq.s32.totalorder %v30, %v36
    %vm39 = vcmask 261120
    %v40 = vsel %vm39, %v12, -inf
    %41 = vmax.xlane.f32.xlu0 %v40
    %v42 = vpop.xlane.xlu0 %41
    %v43 = vsel %vm39, %v13, -inf
    %44 = vmax.xlane.f32.xlu0 %v43
    %v45 = vpop.xlane.xlu0 %44
    %v46 = vsub.f32 %v12, %v42
    %v47 = vsub.f32 %v13, %v45
    %v48 = vmul.f32 %v46, 1.442695
    %v49 = vpow.pop %v48
    %v50 = vmul.f32 %v47, 1.442695
    %v51 = vpow.pop %v50
    %v52 = vsel %vm39, %v49, 0.0
    %53 = vadd.xlane.f32.xlu0 %v52
    %v54 = vpop.xlane.xlu0 %53
    %v55 = vsel %vm39, %v51, 0.0
    %56 = vadd.xlane.f32.xlu0 %v55
    %v57 = vpop.xlane.xlu0 %56
    %v58 = vsel %vm37, %v12, 0.0
    %v59 = vsel %vm38, %v13, 0.0
    %v60 = vsel %vm39, %v58, 0.0
    %61 = vadd.xlane.f32.xlu0 %v60
    %v62 = vpop.xlane.xlu0 %61
    %v63 = vsel %vm39, %v59, 0.0
    %64 = vadd.xlane.f32.xlu0 %v63
    %v65 = vpop.xlane.xlu0 %64
    %v66 = vsub.f32 %v42, %v62
    %v67 = vsub.f32 %v45, %v65
    %v68 = vlog2.pop %v54
    %v69 = vmul.f32 %v68, 0.6931472
    %v70 = vlog2.pop %v57
    %v71 = vmul.f32 %v70, 0.6931472
    %v72 = vadd.f32 %v66, %v69
    %v73 = vadd.f32 %v67, %v71
    %vm74 = vcmp.eq.f32.partialorder %v62, %v42
    %vm75 = vcmp.eq.f32.partialorder %v65, %v45
    %v76 = vsel %vm27, %v72, 0.0
    %v77 = vsel %vm28, %v73, 0.0
    %vm78 = vcmask 7168
    %v79 = vsel %vm78, %v76, 0.0
    %v80 = vsel %vm78, %v77, 0.0
    %v81 = vadd.f32 %v79, %v80
    %82 = vadd.xlane.f32.xlu0 %v81
    %v83 = vpop.xlane.xlu0 %82
    %v84 = vrot.slane %v83, 4
    %v85 = vadd.f32 %v83, %v84
    %v86 = vrot.slane %v85, 2
    %v87 = vadd.f32 %v85, %v86
    %v88 = vrot.slane %v87, 1
    %v89 = vadd.f32 %v87, %v88
    %s90 = vtos %v89
    %vm91 = vmand %vm27, %vm74
    %vm92 = vmand %vm28, %vm75
    %v93 = vsel %vm91, 1.0, 0.0
    %v94 = vsel %vm92, 1.0, 0.0
    %v95 = vsel %vm78, %v93, 0.0
    %v96 = vsel %vm78, %v94, 0.0
    %v97 = vadd.f32 %v95, %v96
    %98 = vadd.xlane.f32.xlu0 %v97
    %v99 = vpop.xlane.xlu0 %98
    %v100 = vrot.slane %v99, 4
    %v101 = vadd.f32 %v99, %v100
    %v102 = vrot.slane %v101, 2
    %v103 = vadd.f32 %v101, %v102
    %v104 = vrot.slane %v103, 1
    %v105 = vadd.f32 %v103, %v104
    %s106 = vtos %v105
    %v107 = vsel %vm27, 1.0, 0.0
    %v108 = vsel %vm28, 1.0, 0.0
    %v109 = vsel %vm78, %v107, 0.0
    %v110 = vsel %vm78, %v108, 0.0
    %v111 = vadd.f32 %v109, %v110
    %112 = vadd.xlane.f32.xlu0 %v111
    %v113 = vpop.xlane.xlu0 %112
    %v114 = vrot.slane %v113, 4
    %v115 = vadd.f32 %v113, %v114
    %v116 = vrot.slane %v115, 2
    %v117 = vadd.f32 %v115, %v116
    %v118 = vrot.slane %v117, 1
    %v119 = vadd.f32 %v117, %v118
    %s120 = vtos %v119
    %vm121 = vcmp.eq.s32.totalorder %v30, 0
    %vm122 = vcmp.eq.s32.totalorder %v30, 1
    %vm123 = vcmp.eq.s32.totalorder %v30, 2
    %v124 = vstv %s120
    %v125 = vsel %vm123, %v124, 0.0
    %v126 = vstv %s106
    %v127 = vsel %vm122, %v126, %v125
    %v128 = vstv %s90
    %v129 = vsel %vm121, %v128, %v127
    %130 = vst [vmem:[#allocation2] sm:$0xff] %v129
    // Predicated region
    $region10: #{tpu_custom_call.1} parent=1 // pred_check
      _
    $region11: #{tpu_custom_call.1} parent=1 // pred_check_branch
      %132 = sbr.rel (0) target = $region13
    $region12: #{tpu_custom_call.1} parent=1 // pred_region
      %s134 = ssub.s32 128, 128
      %135 = vsyncadd [#allocation3], %s134
      %s137 = sshll.u32 [#allocation2], 4
      %s138 = int_to_ptr.vmem [resolvable:$true] %s137
      %140 = dma.vmem_to_hbm [thread:$0]  %s138, 128, %s2, [#allocation3]
    $region13: #{tpu_custom_call.1} parent=1 // pred_fallthru
      _
    // Predicated region
    $region14: #{tpu_custom_call.1} parent=1 // pred_check
      _
    $region15: #{tpu_custom_call.1} parent=1 // pred_check_branch
      %142 = sbr.rel (0) target = $region17
    $region16: #{tpu_custom_call.1} parent=1 // pred_region
      %143 = dma.done [#allocation3], 128
    $region17: #{tpu_custom_call.1} parent=1 // pred_fallthru
      _
    %144 = vsyncpa [#allocation3], 1

</llo_original>
